<compile_context>
chip_gen: v7x
topology: tpu7x:2x2x1
jax: 0.10.0
libtpu: 0.0.40
codegen_flags: <defaults>
</compile_context>

<pallas_src>
import jax
import jax.numpy as jnp
from jax.experimental import pallas as pl
from jax.experimental.pallas import tpu as pltpu

IN_FEATURES = 2
OUT_FEATURES = 2


def _round_up(x, m):
    return ((x + m - 1) // m) * m


def _linear_kernel(wb_ref, x_ref, o_ref):
    # wb_ref: SMEM (6,) f32 = [w00, w01, w10, w11, b0, b1]
    # x_ref : VMEM (IN=2, TILE_M) f32  (feature-major / lane-dense)
    # o_ref : VMEM (OUT=2, TILE_M) f32
    x = x_ref[...]                # (2, TILE_M)
    x0 = x[0:1, :]                # (1, TILE_M)
    x1 = x[1:2, :]                # (1, TILE_M)

    w00 = wb_ref[0]
    w01 = wb_ref[1]
    w10 = wb_ref[2]
    w11 = wb_ref[3]
    b0 = wb_ref[4]
    b1 = wb_ref[5]

    # Two broadcast FMAs on the VPU; full-lane (unmasked) stores.
    o_ref[0:1, :] = x0 * w00 + x1 * w01 + b0
    o_ref[1:2, :] = x0 * w10 + x1 * w11 + b1


def linear_pallas(x, weight, bias, *, tile_m=512):
    """x: (B, S, 2) f32; weight: (2, 2); bias: (2,). Returns (B, S, 2)."""
    B, S, IN = x.shape
    OUT, IN_w = weight.shape
    assert IN == IN_FEATURES and IN_w == IN_FEATURES and OUT == OUT_FEATURES
    M = B * S

    # Feature-major (lane-dense) layout: the big dim M lands on the lane axis.
    x_t = x.reshape(M, IN).T.astype(jnp.float32)          # (IN, M)

    tile = min(tile_m, _round_up(M, 128))                  # lane dim multiple of 128
    m_pad = _round_up(M, tile)
    if m_pad != M:
        x_t = jnp.pad(x_t, ((0, 0), (0, m_pad - M)))

    # Weight + bias as 6 scalars in SMEM (no VMEM DMA for 24 bytes of params).
    wb = jnp.concatenate(
        [weight.reshape(-1), bias.reshape(-1)]).astype(jnp.float32)  # (6,)

    out_t = pl.pallas_call(
        _linear_kernel,
        out_shape=jax.ShapeDtypeStruct((OUT, m_pad), jnp.float32),
        grid_spec=pltpu.PrefetchScalarGridSpec(
            num_scalar_prefetch=1,
            grid=(m_pad // tile,),
            in_specs=[pl.BlockSpec((IN, tile), lambda i, wb: (0, i))],
            out_specs=pl.BlockSpec((OUT, tile), lambda i, wb: (0, i)),
        ),
        compiler_params=pltpu.CompilerParams(
            dimension_semantics=("parallel",),
        ),
    )(wb, x_t)

    # NOTE: at tiny M the XLA fusion of x @ W.T + b is strictly faster than any
    # pallas_call; the Pallas path is kept unconditionally here for the demo.
    return out_t[:, :M].T.reshape(B, S, OUT).astype(x.dtype)


class Model:
    """JAX/Pallas port of the PyTorch Model (Linear(2,2); permute output is dead code)."""

    def __init__(self, key):
        k_w, k_b = jax.random.split(key)
        bound = 1.0 / (IN_FEATURES ** 0.5)
        # Deterministic init mirroring nn.Linear's uniform(-1/sqrt(in), 1/sqrt(in)).
        self.weight = jax.random.uniform(
            k_w, (OUT_FEATURES, IN_FEATURES), jnp.float32, -bound, bound
        )
        self.bias = jax.random.uniform(
            k_b, (OUT_FEATURES,), jnp.float32, -bound, bound
        )

    def forward(self, x1):
        v1 = linear_pallas(x1, self.weight, self.bias)
        # v2 = v1.transpose(0, 2, 1)  # computed-then-discarded in the reference; dead code.
        return v1


if __name__ == "__main__":
    key = jax.random.PRNGKey(0)
    k_model, k_x1, k_x2 = jax.random.split(key, 3)

    model = Model(k_model)

    # Small 3D input (batch=2, seq=8, features=2) consistent with permute(0, 2, 1).
    x1 = jax.random.normal(k_x1, (2, 8, IN_FEATURES), jnp.float32)
    out = jax.block_until_ready(model.forward(x1))
    ref = x1 @ model.weight.T + model.bias
    assert out.shape == (2, 8, OUT_FEATURES)
    assert jnp.allclose(out, ref, atol=1e-5, rtol=1e-5)

    # Second (still small) shape exercising the padded, multi-tile grid path.
    x2 = jax.random.normal(k_x2, (2, 320, IN_FEATURES), jnp.float32)
    out2 = jax.block_until_ready(model.forward(x2))
    ref2 = x2 @ model.weight.T + model.bias
    assert out2.shape == (2, 320, OUT_FEATURES)
    assert jnp.allclose(out2, ref2, atol=1e-5, rtol=1e-5)

    print("KERNEL_OK")
</pallas_src>

<mosaic_0001>
module attributes {stable_mosaic.version = 11 : i64} {
  func.func @_linear_kernel(%arg0: i32, %arg1: memref<6xf32, #tpu.memory_space<smem>>, %arg2: memref<2x128xf32, #tpu.memory_space<vmem>>, %arg3: memref<2x128xf32, #tpu.memory_space<vmem>>) attributes {dimension_semantics = [#tpu.dimension_semantics<parallel>], iteration_bounds = array<i64: 1>, scalar_prefetch = 1 : i64, scratch_operands = 0 : i64, tpu.core_type = #tpu.core_type<tc>, window_params = [{transform_indices = @transform_0, window_bounds = array<i64: 2, 128>}, {transform_indices = @transform_1, window_bounds = array<i64: 2, 128>}]} {
    %c0 = arith.constant 0 : index
    %c0_0 = arith.constant 0 : index
    %0 = vector.load %arg2[%c0, %c0_0] : memref<2x128xf32, #tpu.memory_space<vmem>>, vector<2x128xf32>
    %1 = vector.extract_strided_slice %0 {offsets = [0, 0], sizes = [1, 128], strides = [1, 1]} : vector<2x128xf32> to vector<1x128xf32>
    %2 = vector.extract_strided_slice %0 {offsets = [1, 0], sizes = [1, 128], strides = [1, 1]} : vector<2x128xf32> to vector<1x128xf32>
    %c0_1 = arith.constant 0 : index
    %3 = memref.load %arg1[%c0_1] : memref<6xf32, #tpu.memory_space<smem>>
    %c1 = arith.constant 1 : index
    %4 = memref.load %arg1[%c1] : memref<6xf32, #tpu.memory_space<smem>>
    %c2 = arith.constant 2 : index
    %5 = memref.load %arg1[%c2] : memref<6xf32, #tpu.memory_space<smem>>
    %c3 = arith.constant 3 : index
    %6 = memref.load %arg1[%c3] : memref<6xf32, #tpu.memory_space<smem>>
    %c4 = arith.constant 4 : index
    %7 = memref.load %arg1[%c4] : memref<6xf32, #tpu.memory_space<smem>>
    %c5 = arith.constant 5 : index
    %8 = memref.load %arg1[%c5] : memref<6xf32, #tpu.memory_space<smem>>
    %9 = vector.broadcast %3 : f32 to vector<1x128xf32>
    %10 = arith.mulf %1, %9 : vector<1x128xf32>
    %11 = vector.broadcast %4 : f32 to vector<1x128xf32>
    %12 = arith.mulf %2, %11 : vector<1x128xf32>
    %13 = arith.addf %10, %12 : vector<1x128xf32>
    %14 = vector.broadcast %7 : f32 to vector<1x128xf32>
    %15 = arith.addf %13, %14 : vector<1x128xf32>
    %c0_2 = arith.constant 0 : index
    %c0_3 = arith.constant 0 : index
    %16 = vector.load %arg3[%c0_2, %c0_3] : memref<2x128xf32, #tpu.memory_space<vmem>>, vector<1x128xf32>
    tpu.vector_store %arg3[%c0_2, %c0_3], %15 {strides = array<i32>} : memref<2x128xf32, #tpu.memory_space<vmem>>, vector<1x128xf32>,
    %17 = vector.broadcast %5 : f32 to vector<1x128xf32>
    %18 = arith.mulf %1, %17 : vector<1x128xf32>
    %19 = vector.broadcast %6 : f32 to vector<1x128xf32>
    %20 = arith.mulf %2, %19 : vector<1x128xf32>
    %21 = arith.addf %18, %20 : vector<1x128xf32>
    %22 = vector.broadcast %8 : f32 to vector<1x128xf32>
    %23 = arith.addf %21, %22 : vector<1x128xf32>
    %c1_4 = arith.constant 1 : index
    %c0_5 = arith.constant 0 : index
    %24 = vector.load %arg3[%c1_4, %c0_5] : memref<2x128xf32, #tpu.memory_space<vmem>>, vector<1x128xf32>
    tpu.vector_store %arg3[%c1_4, %c0_5], %23 {strides = array<i32>} : memref<2x128xf32, #tpu.memory_space<vmem>>, vector<1x128xf32>,
    return
  }
  func.func @transform_0(%arg0: i32, %arg1: memref<6xf32, #tpu.memory_space<smem>>) -> (i32, i32) {
    %c0_i32 = arith.constant 0 : i32
    %c0_i32_0 = arith.constant 0 : i32
    return %c0_i32, %arg0 : i32, i32
  }
  func.func @transform_1(%arg0: i32, %arg1: memref<6xf32, #tpu.memory_space<smem>>) -> (i32, i32) {
    %c0_i32 = arith.constant 0 : i32
    %c0_i32_0 = arith.constant 0 : i32
    return %c0_i32, %arg0 : i32, i32
  }
}

</mosaic_0001>

<llo_original>
// kernel: tpu_custom_call.1
$region0: #{tpu_custom_call.1}
  #allocation0 [shape = 'u32[]', space=smem, size = 0x4, offset = 0x4, fixed_abs, tag = 'smem constant byte address 0x4 - core index']
  #allocation1 [shape = 'u32[144,128]{1,0:T(1,128)}', space=vmem, size = 0x12000, scoped, tag = 'internal scratch']
  #allocation2 [shape = 's32[1]{0}', space=sflag, size = 0x4, scoped, tag = 'scoped memory for tpu_custom_call.1']
  #allocation3 [shape = 'u8[512]{0}', space=smem, size = 0x200, scoped, tag = 'prefetched SMEM operand 0']
  %s0 = inlined_call_operand.hbm [shape: f32[6], index: 0, kind: input, shape index: {}]
  %s1 = inlined_call_operand.vmem [shape: f32[2,128], index: 1, kind: input, shape index: {}]
  %s2 = inlined_call_operand.hbm [shape: f32[2,128], index: 2, kind: output, shape index: {}]
  %s3 = sld [smem:[#allocation0]]
  $region14: #{tpu_custom_call.1} parent=0
    _
  %s5 = ssub.s32 1, %s3
  %s6 = scalar_select 0, %s5, %s3
  %8 = dma.hbm_to_smem %s0, 16, [#allocation3], [#allocation2]
  %9 = dma.done [#allocation2], 16
  %10 = sfence
  $region1: #{tpu_custom_call.1} parent=0
    #allocation4 [shape = 'u8[1024]{0}', space=vmem, size = 0x400, scoped, tag = 'output window, operand 0, single buffered']
    #allocation5 [shape = 's32[1]{0}', space=sflag, size = 0x4, scoped, tag = 'scoped memory for tpu_custom_call.1']
    %11 = vsyncpa [#allocation5], 0
    // Predicated region
    $region2: #{tpu_custom_call.1} parent=1 // pred_check
      _
    $region3: #{tpu_custom_call.1} parent=1 // pred_check_branch
      %13 = sbr.rel (0) target = $region5
    $region4: #{tpu_custom_call.1} parent=1 // pred_region
      _
    $region5: #{tpu_custom_call.1} parent=1 // pred_fallthru
      _
    %v14 = vld [vmem:[%s1] sm:$0x3]
    %s15 = sld [smem:[#allocation3]]
    %s16 = sld [smem:[#allocation3 + $0x1]]
    %s17 = sld [smem:[#allocation3 + $0x2]]
    %s18 = sld [smem:[#allocation3 + $0x3]]
    %s19 = sld [smem:[#allocation3 + $0x4]]
    %s20 = sld [smem:[#allocation3 + $0x5]]
    %v21 = vstv %s15
    %v22 = vmul.f32 %v14, %v21
    %v23 = vstv %s16
    %v24 = vmul.f32 %v14, %v23
    %v26 = vrot.slane %v24, 1
    %v28 = vadd.f32 %v22, %v26
    %v29 = vstv %s19
    %v30 = vadd.f32 %v28, %v29
    %31 = vst [vmem:[#allocation4] sm:$0x1] %v30
    %v32 = vstv %s17
    %v33 = vmul.f32 %v14, %v32
    %v34 = vstv %s18
    %v35 = vmul.f32 %v14, %v34
    %v37 = vrot.slane %v35, 1
    %v39 = vadd.f32 %v33, %v37
    %v40 = vstv %s20
    %v41 = vadd.f32 %v39, %v40
    %42 = vst [vmem:[#allocation4 + $0x1] sm:$0x1] %v41
    // Predicated region
    $region6: #{tpu_custom_call.1} parent=1 // pred_check
      _
    $region7: #{tpu_custom_call.1} parent=1 // pred_check_branch
      %44 = sbr.rel (0) target = $region9
    $region8: #{tpu_custom_call.1} parent=1 // pred_region
      %s46 = ssub.s32 32, 32
      %47 = vsyncadd [#allocation5], %s46
      %s49 = sshll.u32 [#allocation4], 4
      %s50 = int_to_ptr.vmem [resolvable:$true] %s49
      %52 = dma.vmem_to_hbm [thread:$0]  %s50, 32, %s2, [#allocation5]
    $region9: #{tpu_custom_call.1} parent=1 // pred_fallthru
      _
    // Predicated region
    $region10: #{tpu_custom_call.1} parent=1 // pred_check
      _
    $region11: #{tpu_custom_call.1} parent=1 // pred_check_branch
      %54 = sbr.rel (0) target = $region13
    $region12: #{tpu_custom_call.1} parent=1 // pred_region
      %55 = dma.done [#allocation5], 32
    $region13: #{tpu_custom_call.1} parent=1 // pred_fallthru
      _
    %56 = vsyncpa [#allocation5], 1

</llo_original>
